<compile_context>
chip_gen: v7x
topology: tpu7x:2x2x1
jax: 0.10.0
libtpu: 0.0.40
codegen_flags: <defaults>
</compile_context>

<pallas_src>
import functools

import numpy as np
import jax
import jax.numpy as jnp
from jax.experimental import pallas as pl
from jax.experimental.pallas import tpu as pltpu


# ----------------------------------------------------------------------------
# helpers
# ----------------------------------------------------------------------------
def _round_up(x, m):
    return ((x + m - 1) // m) * m


def _pad2(a, rows, cols):
    return jnp.pad(a, ((0, rows - a.shape[0]), (0, cols - a.shape[1])))


def _physical_vmem_bytes():
    """Per-TensorCore VMEM capacity; conservative fallback = v7x's 64 MiB."""
    try:
        info = pltpu.get_tpu_info()
        for attr in ("vmem_capacity_bytes", "vmem_size_bytes", "vmem_bytes"):
            v = getattr(info, attr, None)
            if v:
                return int(v)
    except Exception:
        pass
    return 64 * 1024 * 1024


def _pick_tile(n_pad, cap):
    """Largest 128*2^k that divides n_pad and is <= cap (avoids over-padding N)."""
    t = 128
    while t * 2 <= cap and n_pad % (t * 2) == 0:
        t *= 2
    return t


def _bspec(shape, index_map, nbuf=None):
    """BlockSpec with optional multi-buffering; falls back cleanly if this JAX
    version does not expose pipeline_mode / pl.Buffered."""
    if nbuf is not None and hasattr(pl, "Buffered"):
        try:
            return pl.BlockSpec(shape, index_map, pipeline_mode=pl.Buffered(nbuf))
        except TypeError:
            pass
    return pl.BlockSpec(shape, index_map)


def _compiler_params(dim_sems, est_vmem_bytes, vmem_cap):
    # Per-generation cap: ~48 MiB on v7x (64 MiB physical / TC), ~96 MiB on v5e/v6e.
    hi = int(0.75 * vmem_cap)
    limit = int(min(hi, max(2 * est_vmem_bytes + (4 << 20), 32 << 20)))
    return pltpu.CompilerParams(dimension_semantics=dim_sems,
                                vmem_limit_bytes=limit)


def _stage1_vmem_bytes(tm, f_pad, h_pad, c_pad):
    act = 2 * tm * f_pad * 2 + 2 * tm * c_pad * 2                       # bf16 x / hg, 2x bufs
    wts = 2 * 2 * (f_pad * h_pad + h_pad * h_pad + h_pad * c_pad + c_pad * c_pad)
    bias = 2 * 4 * (2 * h_pad + 2 * c_pad)
    tmp = 3 * tm * max(h_pad, c_pad) * 4                                 # f32 intermediates
    return act + wts + bias + tmp


def _stage2_vmem_bytes(tm, tk, n_pad, c_pad, hg_resident):
    a = 3 * tm * tk * 2                                                  # bf16 A_hat, 3 bufs
    hg = (2 * n_pad * c_pad * 2) if hg_resident else (2 * tk * c_pad * 2)
    out = 2 * tm * c_pad * 4                                             # f32 output block
    bias = 2 * c_pad * 4
    return a + hg + out + bias


# ----------------------------------------------------------------------------
# Stage 1: fused MLP + GCN weight transform over node-row tiles.
# ----------------------------------------------------------------------------
def _mlp_transform_kernel(x_ref, w1_ref, b1_ref, w2_ref, b2_ref,
                          w3_ref, b3_ref, wg_ref, hg_ref):
    # Linear 1 + ReLU (dropout is identity at inference)
    h = jnp.dot(x_ref[...], w1_ref[...], preferred_element_type=jnp.float32)
    h = jnp.maximum(h + b1_ref[...], 0.0)
    # Linear 2 + ReLU
    h = jnp.dot(h.astype(w2_ref.dtype), w2_ref[...],
                preferred_element_type=jnp.float32)
    h = jnp.maximum(h + b2_ref[...], 0.0)
    # Output Linear (no activation)
    h = jnp.dot(h.astype(w3_ref.dtype), w3_ref[...],
                preferred_element_type=jnp.float32)
    h = h + b3_ref[...]
    # GCNConv linear transform (aggregation + bias happen in stage 2)
    hg = jnp.dot(h.astype(wg_ref.dtype), wg_ref[...],
                 preferred_element_type=jnp.float32)
    hg_ref[...] = hg.astype(hg_ref.dtype)


# ----------------------------------------------------------------------------
# Stage 2: out = A_hat @ hg + bg, block-sparse over nonzero A_hat blocks.
# Accumulates directly into the resident f32 output block (no scratch).
# ----------------------------------------------------------------------------
def _aggregate_kernel(cols_ref, cnt_ref, a_ref, hg_ref, bg_ref, o_ref, *,
                      tk, max_blocks, hg_resident):
    i = pl.program_id(0)
    j = pl.program_id(1)

    @pl.when(j == 0)
    def _init():
        o_ref[...] = jnp.zeros_like(o_ref)

    @pl.when(j < cnt_ref[i])                     # skip padded / zero-block slots
    def _accumulate():
        if hg_resident:
            kcol = cols_ref[i * max_blocks + j]
            off = pl.multiple_of(kcol * tk, 128)
            hg_blk = hg_ref[pl.ds(off, tk), :]
        else:
            hg_blk = hg_ref[...]
        o_ref[...] += jnp.dot(a_ref[...], hg_blk,
                              preferred_element_type=jnp.float32)

    @pl.when(j == pl.num_programs(1) - 1)
    def _finalize():
        o_ref[...] += bg_ref[...]


# ----------------------------------------------------------------------------
# Host-side block-sparsity metadata for A_hat (scalar-prefetch operands).
# ----------------------------------------------------------------------------
def _block_sparse_metadata(a_pad, tm, tk):
    """Returns (flat cols [nb_i*max_blocks], counts [nb_i], max_blocks)."""
    n_pad = a_pad.shape[0]
    nb_i, nb_k = n_pad // tm, n_pad // tk
    nz = jnp.any(a_pad.reshape(nb_i, tm, nb_k, tk) != 0, axis=(1, 3))
    nz = np.asarray(jax.device_get(nz))                         # [nb_i, nb_k] bool (small)
    counts = nz.sum(axis=1).astype(np.int32)
    max_blocks = max(int(counts.max()), 1)
    cols = np.zeros((nb_i, max_blocks), np.int32)
    for r in range(nb_i):
        idx = np.nonzero(nz[r])[0]
        if idx.size:
            cols[r, :idx.size] = idx
            cols[r, idx.size:] = idx[-1]   # repeat last block -> pipeline skips the re-DMA
    # Flattened 1-D SMEM layout (2-D SMEM pads to [ceil/8*8, ceil/128*128] words).
    return jnp.asarray(cols.reshape(-1)), jnp.asarray(counts), max_blocks
    # TODO(synk): for very large graphs derive this metadata from edge_index directly
    # (never densify A_hat); the kernel itself is unchanged.


# ----------------------------------------------------------------------------
# Wrapper: padding, dtype handling, two pallas_calls.
# ----------------------------------------------------------------------------
def kan_gcn_forward(x, params, a_hat, num_classes):
    """x: [N, F] f32, params: dict of [in,out] weights / [1,out] biases (f32),
    a_hat: [N, N] (or already-padded [n_pad, n_pad]) f32 dense normalized adjacency.
    Returns [N, num_classes] f32."""
    n, f = x.shape
    h_dim = params["w1"].shape[1]
    c = num_classes

    f_pad = _round_up(f, 128)
    h_pad = _round_up(h_dim, 128)
    c_pad = _round_up(c, 128)
    n_pad = _round_up(n, 128)            # pad N only to 128, never to the tile

    vmem_cap = _physical_vmem_bytes()

    # ---- tile selection (decoupled per stage) --------------------------------
    tm1 = _pick_tile(n_pad, 2048)        # stage-1 row tile; weights are resident
    while tm1 > 128 and _stage1_vmem_bytes(tm1, f_pad, h_pad, c_pad) > vmem_cap // 2:
        tm1 //= 2

    tm2 = tk2 = _pick_tile(n_pad, 1024)  # stage-2 A_hat tile
    hg_resident = (2 * n_pad * c_pad * 2) <= int(0.35 * vmem_cap)
    while (tm2 > 128 and
           _stage2_vmem_bytes(tm2, tk2, n_pad, c_pad, hg_resident) > vmem_cap // 2):
        tm2 = tk2 = tm2 // 2

    # ---- pad + cast MXU operands to bf16 (f32 accumulation in-kernel) --------
    xp = _pad2(x, n_pad, f_pad).astype(jnp.bfloat16)
    w1 = _pad2(params["w1"], f_pad, h_pad).astype(jnp.bfloat16)
    b1 = _pad2(params["b1"], 1, h_pad).astype(jnp.float32)
    w2 = _pad2(params["w2"], h_pad, h_pad).astype(jnp.bfloat16)
    b2 = _pad2(params["b2"], 1, h_pad).astype(jnp.float32)
    w3 = _pad2(params["w3"], h_pad, c_pad).astype(jnp.bfloat16)
    b3 = _pad2(params["b3"], 1, c_pad).astype(jnp.float32)
    wg = _pad2(params["wg"], c_pad, c_pad).astype(jnp.bfloat16)
    bg = _pad2(params["bg"], 1, c_pad).astype(jnp.float32)

    if a_hat.shape != (n_pad, n_pad):
        a_hat = _pad2(a_hat, n_pad, n_pad)
    ap = a_hat.astype(jnp.bfloat16)
    # TODO(synk): on v7x an fp8(e4m3) A_hat halves stage-2 HBM bytes; keep bf16 until
    # end-task accuracy with ~6% relative edge-weight error is validated.

    const1 = lambda i: (0, 0)

    # ---- Stage 1: hg = Wg-transform(MLP(x)), bf16 [n_pad, c_pad] -------------
    # TODO(synk): constant-index weight blocks are left on the default double buffer
    # (VMEM headroom is large at these dims); pl.Buffered(1) would halve weight VMEM.
    hg = pl.pallas_call(
        _mlp_transform_kernel,
        out_shape=jax.ShapeDtypeStruct((n_pad, c_pad), jnp.bfloat16),
        grid_spec=pltpu.PrefetchScalarGridSpec(
            num_scalar_prefetch=0,
            grid=(n_pad // tm1,),
            in_specs=[
                pl.BlockSpec((tm1, f_pad), lambda i: (i, 0)),   # x row tile
                pl.BlockSpec((f_pad, h_pad), const1),           # W1 (resident)
                pl.BlockSpec((1, h_pad), const1),               # b1
                pl.BlockSpec((h_pad, h_pad), const1),           # W2
                pl.BlockSpec((1, h_pad), const1),               # b2
                pl.BlockSpec((h_pad, c_pad), const1),           # W3
                pl.BlockSpec((1, c_pad), const1),               # b3
                pl.BlockSpec((c_pad, c_pad), const1),           # Wg
            ],
            out_specs=pl.BlockSpec((tm1, c_pad), lambda i: (i, 0)),
        ),
        compiler_params=_compiler_params(
            ("parallel",), _stage1_vmem_bytes(tm1, f_pad, h_pad, c_pad), vmem_cap),
    )(xp, w1, b1, w2, b2, w3, b3, wg)

    # ---- Stage 2: out = A_hat @ hg + bg over nonzero A_hat blocks only -------
    cols, counts, max_blocks = _block_sparse_metadata(ap, tm2, tk2)
    nb_i = n_pad // tm2

    a_spec = _bspec((tm2, tk2),
                    lambda i, j, cols_r, cnt_r: (i, cols_r[i * max_blocks + j]),
                    nbuf=3)
    if hg_resident:
        # Whole hg lives in VMEM; column block is sliced inside the kernel.
        hg_spec = pl.BlockSpec((n_pad, c_pad), lambda i, j, *_: (0, 0))
    else:
        hg_spec = pl.BlockSpec(
            (tk2, c_pad), lambda i, j, cols_r, cnt_r: (cols_r[i * max_blocks + j], 0))
    bg_spec = pl.BlockSpec((1, c_pad), lambda i, j, *_: (0, 0))
    out_spec = pl.BlockSpec((tm2, c_pad), lambda i, j, *_: (i, 0))

    kernel2 = functools.partial(_aggregate_kernel, tk=tk2,
                                max_blocks=max_blocks, hg_resident=hg_resident)

    out = pl.pallas_call(
        kernel2,
        out_shape=jax.ShapeDtypeStruct((n_pad, c_pad), jnp.float32),
        grid_spec=pltpu.PrefetchScalarGridSpec(
            num_scalar_prefetch=2,
            grid=(nb_i, max_blocks),
            in_specs=[a_spec, hg_spec, bg_spec],
            out_specs=out_spec,
        ),
        compiler_params=_compiler_params(
            ("parallel", "arbitrary"),
            _stage2_vmem_bytes(tm2, tk2, n_pad, c_pad, hg_resident), vmem_cap),
    )(cols, counts, ap, hg, bg)

    return out[:n, :c]


# ----------------------------------------------------------------------------
# Glue: parameter init and dense GCN normalization (plain JAX, outside kernels).
# ----------------------------------------------------------------------------
def init_params(key, num_features, hidden_dim, num_classes):
    ks = jax.random.split(key, 8)

    def lin(kw, kb, fan_in, fan_out):
        bound = 1.0 / jnp.sqrt(fan_in)          # PyTorch-style uniform bound
        w = jax.random.uniform(kw, (fan_in, fan_out), jnp.float32, -bound, bound)
        b = jax.random.uniform(kb, (1, fan_out), jnp.float32, -bound, bound)
        return w, b

    w1, b1 = lin(ks[0], ks[1], num_features, hidden_dim)
    w2, b2 = lin(ks[2], ks[3], hidden_dim, hidden_dim)
    w3, b3 = lin(ks[4], ks[5], hidden_dim, num_classes)
    wg, bg = lin(ks[6], ks[7], num_classes, num_classes)
    return dict(w1=w1, b1=b1, w2=w2, b2=b2, w3=w3, b3=b3, wg=wg, bg=bg)


def build_gcn_adjacency(edge_index, edge_weight, num_nodes, num_nodes_padded=None):
    """Dense A_hat = D^{-1/2}(A + I)D^{-1/2}, matching PyG gcn_norm defaults.
    Built directly at the padded size (single materialization before bf16 cast)."""
    if num_nodes_padded is None:
        num_nodes_padded = num_nodes
    src = edge_index[0]
    dst = edge_index[1]
    if edge_weight is None:
        edge_weight = jnp.ones((edge_index.shape[1],), jnp.float32)
    loop = jnp.arange(num_nodes, dtype=edge_index.dtype)
    src = jnp.concatenate([src, loop])
    dst = jnp.concatenate([dst, loop])
    w = jnp.concatenate([edge_weight, jnp.ones((num_nodes,), jnp.float32)])
    deg = jnp.zeros((num_nodes,), jnp.float32).at[dst].add(w)
    dinv = jnp.where(deg > 0, 1.0 / jnp.sqrt(deg), 0.0)
    norm = dinv[src] * w * dinv[dst]
    # out[dst] += norm * x[src]  =>  A_hat[dst, src] = norm
    a_hat = jnp.zeros((num_nodes_padded, num_nodes_padded),
                      jnp.float32).at[dst, src].add(norm)
    return a_hat


# ----------------------------------------------------------------------------
# Pure-JAX f32 reference (correctness check).
# ----------------------------------------------------------------------------
def reference_forward(x, params, a_hat):
    h = jnp.maximum(x @ params["w1"] + params["b1"], 0.0)
    h = jnp.maximum(h @ params["w2"] + params["b2"], 0.0)
    h = h @ params["w3"] + params["b3"]
    return a_hat @ (h @ params["wg"]) + params["bg"]


if __name__ == "__main__":
    # Small deterministic example: 16 nodes, ring graph (both directions).
    N, F, H, C = 16, 32, 32, 8          # nodes, num_features, hidden_dim, num_classes
    key = jax.random.PRNGKey(0)
    k_x, k_w, k_ew = jax.random.split(key, 3)

    x = jax.random.normal(k_x, (N, F), jnp.float32)

    idx = jnp.arange(N, dtype=jnp.int32)
    src = jnp.concatenate([idx, (idx + 1) % N])
    dst = jnp.concatenate([(idx + 1) % N, idx])
    edge_index = jnp.stack([src, dst])                       # [2, E]
    edge_weight = jax.random.uniform(k_ew, (edge_index.shape[1],), jnp.float32,
                                     0.5, 1.5)

    params = init_params(k_w, F, H, C)
    n_pad = _round_up(N, 128)
    a_hat = build_gcn_adjacency(edge_index, edge_weight, N, num_nodes_padded=n_pad)

    # TODO(synk): nn.Dropout is treated as identity (inference); training-mode
    # dropout would use pltpu.prng_seed / pltpu.stateful_bernoulli in stage 1.

    out = kan_gcn_forward(x, params, a_hat, num_classes=C)
    out = jax.block_until_ready(out)

    ref = reference_forward(x, params, a_hat[:N, :N])
    assert out.shape == (N, C)
    # bf16 MXU operands with f32 accumulation -> loosened tolerance vs f32 ref.
    assert jnp.allclose(out, ref, atol=5e-2, rtol=5e-2), "mismatch vs reference"
    print("KERNEL_OK")
</pallas_src>

<mosaic_0001>
module attributes {stable_mosaic.version = 11 : i64} {
  func.func @_mlp_transform_kernel(%arg0: i32, %arg1: memref<128x128xbf16, #tpu.memory_space<vmem>>, %arg2: memref<128x128xbf16, #tpu.memory_space<vmem>>, %arg3: memref<1x128xf32, #tpu.memory_space<vmem>>, %arg4: memref<128x128xbf16, #tpu.memory_space<vmem>>, %arg5: memref<1x128xf32, #tpu.memory_space<vmem>>, %arg6: memref<128x128xbf16, #tpu.memory_space<vmem>>, %arg7: memref<1x128xf32, #tpu.memory_space<vmem>>, %arg8: memref<128x128xbf16, #tpu.memory_space<vmem>>, %arg9: memref<128x128xbf16, #tpu.memory_space<vmem>>) attributes {dimension_semantics = [#tpu.dimension_semantics<parallel>], iteration_bounds = array<i64: 1>, scalar_prefetch = 0 : i64, scratch_operands = 0 : i64, tpu.core_type = #tpu.core_type<tc>, window_params = [{transform_indices = @transform_0, window_bounds = array<i64: 128, 128>}, {pipeline_mode = #tpu.pipeline_mode<synchronous>, transform_indices = @transform_1, window_bounds = array<i64: 128, 128>}, {pipeline_mode = #tpu.pipeline_mode<synchronous>, transform_indices = @transform_2, window_bounds = array<i64: 1, 128>}, {pipeline_mode = #tpu.pipeline_mode<synchronous>, transform_indices = @transform_3, window_bounds = array<i64: 128, 128>}, {pipeline_mode = #tpu.pipeline_mode<synchronous>, transform_indices = @transform_4, window_bounds = array<i64: 1, 128>}, {pipeline_mode = #tpu.pipeline_mode<synchronous>, transform_indices = @transform_5, window_bounds = array<i64: 128, 128>}, {pipeline_mode = #tpu.pipeline_mode<synchronous>, transform_indices = @transform_6, window_bounds = array<i64: 1, 128>}, {pipeline_mode = #tpu.pipeline_mode<synchronous>, transform_indices = @transform_7, window_bounds = array<i64: 128, 128>}, {transform_indices = @transform_8, window_bounds = array<i64: 128, 128>}]} {
    %c0 = arith.constant 0 : index
    %c0_0 = arith.constant 0 : index
    %0 = vector.load %arg1[%c0, %c0_0] : memref<128x128xbf16, #tpu.memory_space<vmem>>, vector<128x128xbf16>
    %c0_1 = arith.constant 0 : index
    %c0_2 = arith.constant 0 : index
    %1 = vector.load %arg2[%c0_1, %c0_2] : memref<128x128xbf16, #tpu.memory_space<vmem>>, vector<128x128xbf16>
    %cst = arith.constant dense<0.000000e+00> : vector<128x128xf32>
    %2 = tpu.matmul %0, %1, %cst {dimension_numbers = #tpu.dot_dimension_numbers<[1], [0], [0], [1], [0, 0, 1, 1], [], []>} : vector<128x128xbf16>, vector<128x128xbf16>, vector<128x128xf32> -> vector<128x128xf32>
    %c0_3 = arith.constant 0 : index
    %c0_4 = arith.constant 0 : index
    %3 = vector.load %arg3[%c0_3, %c0_4] : memref<1x128xf32, #tpu.memory_space<vmem>>, vector<1x128xf32>
    %4 = vector.broadcast %3 : vector<1x128xf32> to vector<128x128xf32>
    %5 = arith.addf %2, %4 : vector<128x128xf32>
    %cst_5 = arith.constant 0.000000e+00 : f32
    %6 = vector.broadcast %cst_5 : f32 to vector<128x128xf32>
    %7 = arith.maximumf %5, %6 : vector<128x128xf32>
    %8 = arith.truncf %7 : vector<128x128xf32> to vector<128x128xbf16>
    %c0_6 = arith.constant 0 : index
    %c0_7 = arith.constant 0 : index
    %9 = vector.load %arg4[%c0_6, %c0_7] : memref<128x128xbf16, #tpu.memory_space<vmem>>, vector<128x128xbf16>
    %cst_8 = arith.constant dense<0.000000e+00> : vector<128x128xf32>
    %10 = tpu.matmul %8, %9, %cst_8 {dimension_numbers = #tpu.dot_dimension_numbers<[1], [0], [0], [1], [0, 0, 1, 1], [], []>} : vector<128x128xbf16>, vector<128x128xbf16>, vector<128x128xf32> -> vector<128x128xf32>
    %c0_9 = arith.constant 0 : index
    %c0_10 = arith.constant 0 : index
    %11 = vector.load %arg5[%c0_9, %c0_10] : memref<1x128xf32, #tpu.memory_space<vmem>>, vector<1x128xf32>
    %12 = vector.broadcast %11 : vector<1x128xf32> to vector<128x128xf32>
    %13 = arith.addf %10, %12 : vector<128x128xf32>
    %cst_11 = arith.constant 0.000000e+00 : f32
    %14 = vector.broadcast %cst_11 : f32 to vector<128x128xf32>
    %15 = arith.maximumf %13, %14 : vector<128x128xf32>
    %16 = arith.truncf %15 : vector<128x128xf32> to vector<128x128xbf16>
    %c0_12 = arith.constant 0 : index
    %c0_13 = arith.constant 0 : index
    %17 = vector.load %arg6[%c0_12, %c0_13] : memref<128x128xbf16, #tpu.memory_space<vmem>>, vector<128x128xbf16>
    %cst_14 = arith.constant dense<0.000000e+00> : vector<128x128xf32>
    %18 = tpu.matmul %16, %17, %cst_14 {dimension_numbers = #tpu.dot_dimension_numbers<[1], [0], [0], [1], [0, 0, 1, 1], [], []>} : vector<128x128xbf16>, vector<128x128xbf16>, vector<128x128xf32> -> vector<128x128xf32>
    %c0_15 = arith.constant 0 : index
    %c0_16 = arith.constant 0 : index
    %19 = vector.load %arg7[%c0_15, %c0_16] : memref<1x128xf32, #tpu.memory_space<vmem>>, vector<1x128xf32>
    %20 = vector.broadcast %19 : vector<1x128xf32> to vector<128x128xf32>
    %21 = arith.addf %18, %20 : vector<128x128xf32>
    %22 = arith.truncf %21 : vector<128x128xf32> to vector<128x128xbf16>
    %c0_17 = arith.constant 0 : index
    %c0_18 = arith.constant 0 : index
    %23 = vector.load %arg8[%c0_17, %c0_18] : memref<128x128xbf16, #tpu.memory_space<vmem>>, vector<128x128xbf16>
    %cst_19 = arith.constant dense<0.000000e+00> : vector<128x128xf32>
    %24 = tpu.matmul %22, %23, %cst_19 {dimension_numbers = #tpu.dot_dimension_numbers<[1], [0], [0], [1], [0, 0, 1, 1], [], []>} : vector<128x128xbf16>, vector<128x128xbf16>, vector<128x128xf32> -> vector<128x128xf32>
    %25 = arith.truncf %24 : vector<128x128xf32> to vector<128x128xbf16>
    %c0_20 = arith.constant 0 : index
    %c0_21 = arith.constant 0 : index
    %26 = vector.load %arg9[%c0_20, %c0_21] : memref<128x128xbf16, #tpu.memory_space<vmem>>, vector<128x128xbf16>
    tpu.vector_store %arg9[%c0_20, %c0_21], %25 {strides = array<i32>} : memref<128x128xbf16, #tpu.memory_space<vmem>>, vector<128x128xbf16>,
    return
  }
  func.func @transform_0(%arg0: i32) -> (i32, i32) {
    %c0_i32 = arith.constant 0 : i32
    %c0_i32_0 = arith.constant 0 : i32
    return %arg0, %c0_i32 : i32, i32
  }
  func.func @transform_1(%arg0: i32) -> (i32, i32) {
    %c0_i32 = arith.constant 0 : i32
    %c0_i32_0 = arith.constant 0 : i32
    %c0_i32_1 = arith.constant 0 : i32
    return %c0_i32, %c0_i32_0 : i32, i32
  }
  func.func @transform_2(%arg0: i32) -> (i32, i32) {
    %c0_i32 = arith.constant 0 : i32
    %c0_i32_0 = arith.constant 0 : i32
    %c0_i32_1 = arith.constant 0 : i32
    return %c0_i32, %c0_i32_0 : i32, i32
  }
  func.func @transform_3(%arg0: i32) -> (i32, i32) {
    %c0_i32 = arith.constant 0 : i32
    %c0_i32_0 = arith.constant 0 : i32
    %c0_i32_1 = arith.constant 0 : i32
    return %c0_i32, %c0_i32_0 : i32, i32
  }
  func.func @transform_4(%arg0: i32) -> (i32, i32) {
    %c0_i32 = arith.constant 0 : i32
    %c0_i32_0 = arith.constant 0 : i32
    %c0_i32_1 = arith.constant 0 : i32
    return %c0_i32, %c0_i32_0 : i32, i32
  }
  func.func @transform_5(%arg0: i32) -> (i32, i32) {
    %c0_i32 = arith.constant 0 : i32
    %c0_i32_0 = arith.constant 0 : i32
    %c0_i32_1 = arith.constant 0 : i32
    return %c0_i32, %c0_i32_0 : i32, i32
  }
  func.func @transform_6(%arg0: i32) -> (i32, i32) {
    %c0_i32 = arith.constant 0 : i32
    %c0_i32_0 = arith.constant 0 : i32
    %c0_i32_1 = arith.constant 0 : i32
    return %c0_i32, %c0_i32_0 : i32, i32
  }
  func.func @transform_7(%arg0: i32) -> (i32, i32) {
    %c0_i32 = arith.constant 0 : i32
    %c0_i32_0 = arith.constant 0 : i32
    %c0_i32_1 = arith.constant 0 : i32
    return %c0_i32, %c0_i32_0 : i32, i32
  }
  func.func @transform_8(%arg0: i32) -> (i32, i32) {
    %c0_i32 = arith.constant 0 : i32
    %c0_i32_0 = arith.constant 0 : i32
    return %arg0, %c0_i32 : i32, i32
  }
}

</mosaic_0001>

<llo_original>
// kernel: tpu_custom_call.1
$region0: #{tpu_custom_call.1}
  #allocation0 [shape = 'u32[]', space=smem, size = 0x4, offset = 0x4, fixed_abs, tag = 'smem constant byte address 0x4 - core index']
  #allocation1 [shape = 'u32[144,128]{1,0:T(1,128)}', space=vmem, size = 0x12000, scoped, tag = 'internal scratch']
  %s0 = inlined_call_operand.hbm [shape: bf16[128,128], index: 0, kind: input, shape index: {}]
  %s1 = inlined_call_operand.hbm [shape: bf16[128,128], index: 1, kind: input, shape index: {}]
  %s2 = inlined_call_operand.vmem [shape: f32[1,128], index: 2, kind: input, shape index: {}]
  %s3 = inlined_call_operand.hbm [shape: bf16[128,128], index: 3, kind: input, shape index: {}]
  %s4 = inlined_call_operand.vmem [shape: f32[1,128], index: 4, kind: input, shape index: {}]
  %s5 = inlined_call_operand.hbm [shape: bf16[128,128], index: 5, kind: input, shape index: {}]
  %s6 = inlined_call_operand.vmem [shape: f32[1,128], index: 6, kind: input, shape index: {}]
  %s7 = inlined_call_operand.hbm [shape: bf16[128,128], index: 7, kind: input, shape index: {}]
  %s8 = inlined_call_operand.hbm [shape: bf16[128,128], index: 8, kind: output, shape index: {}]
  %s9 = sld [smem:[#allocation0]]
  $region62: #{tpu_custom_call.1} parent=0
    _
  %s11 = ssub.s32 1, %s9
  %s12 = scalar_select 0, %s11, %s9
  $region1: #{tpu_custom_call.1} parent=0
    #allocation2 [shape = 'u8[32768]{0}', space=vmem, size = 0x8000, scoped, tag = 'input window, operand 0, single buffered']
    #allocation3 [shape = 's32[1]{0}', space=sflag, size = 0x4, scoped, tag = 'scoped memory for tpu_custom_call.1']
    #allocation4 [shape = 's32[1]{0}', space=sflag, size = 0x4, scoped, tag = 'scoped memory for tpu_custom_call.1']
    #allocation5 [shape = 'u8[32768]{0}', space=vmem, size = 0x8000, scoped, tag = 'input window, operand 1, single buffered']
    #allocation6 [shape = 's32[1]{0}', space=sflag, size = 0x4, scoped, tag = 'scoped memory for tpu_custom_call.1']
    #allocation7 [shape = 'u8[32768]{0}', space=vmem, size = 0x8000, scoped, tag = 'input window, operand 3, single buffered']
    #allocation8 [shape = 'u8[32768]{0}', space=vmem, size = 0x8000, scoped, tag = 'input window, operand 5, single buffered']
    #allocation9 [shape = 's32[1]{0}', space=sflag, size = 0x4, scoped, tag = 'scoped memory for tpu_custom_call.1']
    #allocation10 [shape = 'u8[32768]{0}', space=vmem, size = 0x8000, scoped, tag = 'input window, operand 7, single buffered']
    #allocation11 [shape = 'u8[32768]{0}', space=vmem, size = 0x8000, scoped, tag = 'output window, operand 0, single buffered']
    %13 = vsyncpa [#allocation3], 0
    %14 = vsyncpa [#allocation6], 0
    %15 = vsyncpa [#allocation9], 0
    %16 = vsyncpa [#allocation4], 0
    // Predicated region
    $region2: #{tpu_custom_call.1} parent=1 // pred_check
      _
    $region3: #{tpu_custom_call.1} parent=1 // pred_check_branch
      %18 = sbr.rel (0) target = $region5
    $region4: #{tpu_custom_call.1} parent=1 // pred_region
      %s20 = ssub.s32 1024, 1024
      %21 = vsyncadd [#allocation3], %s20
      %s22 = sshll.u32 [#allocation2], 4
      %s23 = int_to_ptr.vmem [resolvable:$true] %s22
      %28 = dma.hbm_to_vmem [thread:$0]  %s0, 1024, %s23, [#allocation3], 64, 64, 4
    $region5: #{tpu_custom_call.1} parent=1 // pred_fallthru
      _
    // Predicated region
    $region6: #{tpu_custom_call.1} parent=1 // pred_check
      _
    $region7: #{tpu_custom_call.1} parent=1 // pred_check_branch
      %30 = sbr.rel (0) target = $region9
    $region8: #{tpu_custom_call.1} parent=1 // pred_region
      %s32 = ssub.s32 1024, 1024
      %33 = vsyncadd [#allocation6], %s32
      %s34 = sshll.u32 [#allocation5], 4
      %s35 = int_to_ptr.vmem [resolvable:$true] %s34
      %40 = dma.hbm_to_vmem [thread:$0]  %s1, 1024, %s35, [#allocation6], 64, 64, 4
    $region9: #{tpu_custom_call.1} parent=1 // pred_fallthru
      _
    // Predicated region
    $region10: #{tpu_custom_call.1} parent=1 // pred_check
      _
    $region11: #{tpu_custom_call.1} parent=1 // pred_check_branch
      %42 = sbr.rel (0) target = $region13
    $region12: #{tpu_custom_call.1} parent=1 // pred_region
      _
    $region13: #{tpu_custom_call.1} parent=1 // pred_fallthru
      _
    // Predicated region
    $region14: #{tpu_custom_call.1} parent=1 // pred_check
      _
    $region15: #{tpu_custom_call.1} parent=1 // pred_check_branch
      %44 = sbr.rel (0) target = $region17
    $region16: #{tpu_custom_call.1} parent=1 // pred_region
      %s46 = ssub.s32 1024, 1024
      %47 = vsyncadd [#allocation6], %s46
      %s48 = sshll.u32 [#allocation7], 4
      %s49 = int_to_ptr.vmem [resolvable:$true] %s48
      %54 = dma.hbm_to_vmem [thread:$0]  %s3, 1024, %s49, [#allocation6], 64, 64, 4
    $region17: #{tpu_custom_call.1} parent=1 // pred_fallthru
      _
    // Predicated region
    $region18: #{tpu_custom_call.1} parent=1 // pred_check
      _
    $region19: #{tpu_custom_call.1} parent=1 // pred_check_branch
      %56 = sbr.rel (0) target = $region21
    $region20: #{tpu_custom_call.1} parent=1 // pred_region
      _
    $region21: #{tpu_custom_call.1} parent=1 // pred_fallthru
      _
    // Predicated region
    $region22: #{tpu_custom_call.1} parent=1 // pred_check
      _
    $region23: #{tpu_custom_call.1} parent=1 // pred_check_branch
      %58 = sbr.rel (0) target = $region25
    $region24: #{tpu_custom_call.1} parent=1 // pred_region
      %s60 = ssub.s32 1024, 1024
      %61 = vsyncadd [#allocation9], %s60
      %s62 = sshll.u32 [#allocation8], 4
      %s63 = int_to_ptr.vmem [resolvable:$true] %s62
      %68 = dma.hbm_to_vmem [thread:$0]  %s5, 1024, %s63, [#allocation9], 64, 64, 4
    $region25: #{tpu_custom_call.1} parent=1 // pred_fallthru
      _
    // Predicated region
    $region26: #{tpu_custom_call.1} parent=1 // pred_check
      _
    $region27: #{tpu_custom_call.1} parent=1 // pred_check_branch
      %70 = sbr.rel (0) target = $region29
    $region28: #{tpu_custom_call.1} parent=1 // pred_region
      _
    $region29: #{tpu_custom_call.1} parent=1 // pred_fallthru
      _
    // Predicated region
    $region30: #{tpu_custom_call.1} parent=1 // pred_check
      _
    $region31: #{tpu_custom_call.1} parent=1 // pred_check_branch
      %72 = sbr.rel (0) target = $region33
    $region32: #{tpu_custom_call.1} parent=1 // pred_region
      %s74 = ssub.s32 1024, 1024
      %75 = vsyncadd [#allocation9], %s74
      %s76 = sshll.u32 [#allocation10], 4
      %s77 = int_to_ptr.vmem [resolvable:$true] %s76
      %82 = dma.hbm_to_vmem [thread:$0]  %s7, 1024, %s77, [#allocation9], 64, 64, 4
    $region33: #{tpu_custom_call.1} parent=1 // pred_fallthru
      _
    // Predicated region
    $region34: #{tpu_custom_call.1} parent=1 // pred_check
      _
    $region35: #{tpu_custom_call.1} parent=1 // pred_check_branch
      %84 = sbr.rel (0) target = $region37
    $region36: #{tpu_custom_call.1} parent=1 // pred_region
      %85 = dma.done [#allocation3], 1024
    $region37: #{tpu_custom_call.1} parent=1 // pred_fallthru
      _
    // Predicated region
    $region38: #{tpu_custom_call.1} parent=1 // pred_check
      _
    $region39: #{tpu_custom_call.1} parent=1 // pred_check_branch
      %87 = sbr.rel (0) target = $region41
    $region40: #{tpu_custom_call.1} parent=1 // pred_region
      %88 = dma.done [#allocation6], 1024
    $region41: #{tpu_custom_call.1} parent=1 // pred_fallthru
      _
    // Predicated region
    $region42: #{tpu_custom_call.1} parent=1 // pred_check
      _
    $region43: #{tpu_custom_call.1} parent=1 // pred_check_branch
      %90 = sbr.rel (0) target = $region45
    $region44: #{tpu_custom_call.1} parent=1 // pred_region
      %91 = dma.done [#allocation6], 1024
    $region45: #{tpu_custom_call.1} parent=1 // pred_fallthru
      _
    // Predicated region
    $region46: #{tpu_custom_call.1} parent=1 // pred_check
      _
    $region47: #{tpu_custom_call.1} parent=1 // pred_check_branch
      %93 = sbr.rel (0) target = $region49
    $region48: #{tpu_custom_call.1} parent=1 // pred_region
      %94 = dma.done [#allocation9], 1024
    $region49: #{tpu_custom_call.1} parent=1 // pred_fallthru
      _
    // Predicated region
    $region50: #{tpu_custom_call.1} parent=1 // pred_check
      _
    $region51: #{tpu_custom_call.1} parent=1 // pred_check_branch
      %96 = sbr.rel (0) target = $region53
    $region52: #{tpu_custom_call.1} parent=1 // pred_region
      %97 = dma.done [#allocation9], 1024
    $region53: #{tpu_custom_call.1} parent=1 // pred_fallthru
      _
    %v99 = vld [vmem:[#allocation2] sm:$0xf]
    %v100 = vld [vmem:[#allocation2 + $0x4] sm:$0xf]
    %v101 = vld [vmem:[#allocation2 + $0x8] sm:$0xf]
    %v102 = vld [vmem:[#allocation2 + $0xc] sm:$0xf]
    %v103 = vld [vmem:[#allocation2 + $0x10] sm:$0xf]
    %v104 = vld [vmem:[#allocation2 + $0x14] sm:$0xf]
    %v105 = vld [vmem:[#allocation2 + $0x18] sm:$0xf]
    %v106 = vld [vmem:[#allocation2 + $0x1c] sm:$0xf]
    %v107 = vld [vmem:[#allocation2 + $0x20] sm:$0xf]
    %v108 = vld [vmem:[#allocation2 + $0x24] sm:$0xf]
    %v109 = vld [vmem:[#allocation2 + $0x28] sm:$0xf]
    %v110 = vld [vmem:[#allocation2 + $0x2c] sm:$0xf]
    %v111 = vld [vmem:[#allocation2 + $0x30] sm:$0xf]
    %v112 = vld [vmem:[#allocation2 + $0x34] sm:$0xf]
    %v113 = vld [vmem:[#allocation2 + $0x38] sm:$0xf]
    %v114 = vld [vmem:[#allocation2 + $0x3c] sm:$0xf]
    %v115 = vld [vmem:[#allocation5] sm:$0xf]
    %v116 = vld [vmem:[#allocation5 + $0x4] sm:$0xf]
    %v117 = vld [vmem:[#allocation5 + $0x8] sm:$0xf]
    %v118 = vld [vmem:[#allocation5 + $0xc] sm:$0xf]
    %v119 = vld [vmem:[#allocation5 + $0x10] sm:$0xf]
    %v120 = vld [vmem:[#allocation5 + $0x14] sm:$0xf]
    %v121 = vld [vmem:[#allocation5 + $0x18] sm:$0xf]
    %v122 = vld [vmem:[#allocation5 + $0x1c] sm:$0xf]
    %v123 = vld [vmem:[#allocation5 + $0x20] sm:$0xf]
    %v124 = vld [vmem:[#allocation5 + $0x24] sm:$0xf]
    %v125 = vld [vmem:[#allocation5 + $0x28] sm:$0xf]
    %v126 = vld [vmem:[#allocation5 + $0x2c] sm:$0xf]
    %v127 = vld [vmem:[#allocation5 + $0x30] sm:$0xf]
    %v128 = vld [vmem:[#allocation5 + $0x34] sm:$0xf]
    %v129 = vld [vmem:[#allocation5 + $0x38] sm:$0xf]
    %v130 = vld [vmem:[#allocation5 + $0x3c] sm:$0xf]
    %v131 = vld [vmem:[%s2] sm:$0x1]
    %v133 = vlaneseq
    %v134 = vshrl.u32 %v133, 7
    %v135 = vsub.s32 0, %v134
    %v136 = vrot.slane %v131, %v135
    %v154 = vunpack.c.l.b16 %v99
    %v155 = vunpack.c.l.b16 %v100
    %v156 = vunpack.c.l.b16 %v101
    %v157 = vunpack.c.l.b16 %v102
    %v158 = vunpack.c.l.b16 %v103
    %v159 = vunpack.c.l.b16 %v104
    %v160 = vunpack.c.l.b16 %v105
    %v161 = vunpack.c.l.b16 %v106
    %v162 = vunpack.c.l.b16 %v107
    %v163 = vunpack.c.l.b16 %v108
    %v164 = vunpack.c.l.b16 %v109
    %v165 = vunpack.c.l.b16 %v110
    %v166 = vunpack.c.l.b16 %v111
    %v167 = vunpack.c.l.b16 %v112
    %v168 = vunpack.c.l.b16 %v113
    %v169 = vunpack.c.l.b16 %v114
    %v170 = vpack.c.b16 %v155, %v154
    %v171 = vpack.c.b16 %v157, %v156
    %v172 = vpack.c.b16 %v159, %v158
    %v173 = vpack.c.b16 %v161, %v160
    %v174 = vpack.c.b16 %v163, %v162
    %v175 = vpack.c.b16 %v165, %v164
    %v176 = vpack.c.b16 %v167, %v166
    %v177 = vpack.c.b16 %v169, %v168
    %v202 = vunpack.c.l.b16 %v115
    %v203 = vunpack.c.l.b16 %v116
    %v204 = vunpack.c.l.b16 %v117
    %v205 = vunpack.c.l.b16 %v118
    %v206 = vunpack.c.l.b16 %v119
    %v207 = vunpack.c.l.b16 %v120
    %v208 = vunpack.c.l.b16 %v121
    %v209 = vunpack.c.l.b16 %v122
    %v210 = vunpack.c.l.b16 %v123
    %v211 = vunpack.c.l.b16 %v124
    %v212 = vunpack.c.l.b16 %v125
    %v213 = vunpack.c.l.b16 %v126
    %v214 = vunpack.c.l.b16 %v127
    %v215 = vunpack.c.l.b16 %v128
    %v216 = vunpack.c.l.b16 %v129
    %v217 = vunpack.c.l.b16 %v130
    %v218 = vpack.c.b16 %v203, %v202
    %v219 = vpack.c.b16 %v205, %v204
    %v220 = vpack.c.b16 %v207, %v206
    %v221 = vpack.c.b16 %v209, %v208
    %v222 = vpack.c.b16 %v211, %v210
    %v223 = vpack.c.b16 %v213, %v212
    %v224 = vpack.c.b16 %v215, %v214
    %v225 = vpack.c.b16 %v217, %v216
    %234 = vmatprep.subr.bf16.mxu0 0
    %235 = vmatpush1.bf16.msra.mxu0 %v218
    %236 = vmatprep.subr.bf16.mxu0 0
    %237 = vmatpush1.bf16.msra.mxu0 %v219
    %238 = vmatprep.subr.bf16.mxu0 0
    %239 = vmatpush1.bf16.msra.mxu0 %v220
    %240 = vmatprep.subr.bf16.mxu0 0
    %241 = vmatpush1.bf16.msra.mxu0 %v221
    %242 = vmatprep.subr.bf16.mxu0 0
    %243 = vmatpush1.bf16.msra.mxu0 %v222
    %244 = vmatprep.subr.bf16.mxu0 0
    %245 = vmatpush1.bf16.msra.mxu0 %v223
    %246 = vmatprep.subr.bf16.mxu0 0
    %247 = vmatpush1.bf16.msra.mxu0 %v224
    %248 = vmatprep.subr.bf16.mxu0 0
    %249 = vmatpush1.bf16.msra.mxu0 %v225
    %250 = vmatprep.subr.bf16.mxu0 0
    %251 = vmatpush1.bf16.msra.mxu0 0
    %252 = vmatprep.subr.bf16.mxu0 0
    %253 = vmatpush1.bf16.msra.mxu0 0
    %254 = vmatprep.subr.bf16.mxu0 0
    %255 = vmatpush1.bf16.msra.mxu0 0
    %256 = vmatprep.subr.bf16.mxu0 0
    %257 = vmatpush1.bf16.msra.mxu0 0
    %258 = vmatprep.subr.bf16.mxu0 0
    %259 = vmatpush1.bf16.msra.mxu0 0
    %260 = vmatprep.subr.bf16.mxu0 0
    %261 = vmatpush1.bf16.msra.mxu0 0
    %262 = vmatprep.subr.bf16.mxu0 0
    %263 = vmatpush1.bf16.msra.mxu0 0
    %264 = vmatprep.subr.bf16.mxu0 0
    %265 = vmatpush1.bf16.msra.mxu0 0
    %266 = vmatprep.mubr.bf16.mxu0 0
    %267 = vmatmul.mubr.bf16.gmra.mrb[0].mxu0 %v170
    %v268 = vpop.f32.mrb[0].mxu0
    %v269 = vadd.f32 %v136, %v268
    %v270 = vpop.f32.mrb[0].mxu0
    %v271 = vpop.f32.mrb[0].mxu0
    %v272 = vadd.f32 %v136, %v271
    %v273 = vpop.f32.mrb[0].mxu0
    %274 = vmatprep.mubr.bf16.mxu0 0
    %275 = vmatmul.mubr.bf16.gmra.mrb[0].mxu0 %v171
    %v276 = vpop.f32.mrb[0].mxu0
    %v277 = vadd.f32 %v136, %v276
    %v278 = vpop.f32.mrb[0].mxu0
    %v279 = vpop.f32.mrb[0].mxu0
    %v280 = vadd.f32 %v136, %v279
    %v281 = vpop.f32.mrb[0].mxu0
    %282 = vmatprep.mubr.bf16.mxu0 0
    %283 = vmatmul.mubr.bf16.gmra.mrb[0].mxu0 %v172
    %v284 = vpop.f32.mrb[0].mxu0
    %v285 = vadd.f32 %v136, %v284
    %v286 = vpop.f32.mrb[0].mxu0
    %v287 = vpop.f32.mrb[0].mxu0
    %v288 = vadd.f32 %v136, %v287
    %v289 = vpop.f32.mrb[0].mxu0
    %290 = vmatprep.mubr.bf16.mxu0 0
    %291 = vmatmul.mubr.bf16.gmra.mrb[0].mxu0 %v173
    %v292 = vpop.f32.mrb[0].mxu0
    %v293 = vadd.f32 %v136, %v292
    %v294 = vpop.f32.mrb[0].mxu0
    %v295 = vpop.f32.mrb[0].mxu0
    %v296 = vadd.f32 %v136, %v295
    %v297 = vpop.f32.mrb[0].mxu0
    %298 = vmatprep.mubr.bf16.mxu0 0
    %299 = vmatmul.mubr.bf16.gmra.mrb[0].mxu0 %v174
    %v300 = vpop.f32.mrb[0].mxu0
    %v301 = vadd.f32 %v136, %v300
    %v302 = vpop.f32.mrb[0].mxu0
    %v303 = vpop.f32.mrb[0].mxu0
    %v304 = vadd.f32 %v136, %v303
    %v305 = vpop.f32.mrb[0].mxu0
    %306 = vmatprep.mubr.bf16.mxu0 0
    %307 = vmatmul.mubr.bf16.gmra.mrb[0].mxu0 %v175
    %v308 = vpop.f32.mrb[0].mxu0
    %v309 = vadd.f32 %v136, %v308
    %v310 = vpop.f32.mrb[0].mxu0
    %v311 = vpop.f32.mrb[0].mxu0
    %v312 = vadd.f32 %v136, %v311
    %v313 = vpop.f32.mrb[0].mxu0
    %314 = vmatprep.mubr.bf16.mxu0 0
    %315 = vmatmul.mubr.bf16.gmra.mrb[0].mxu0 %v176
    %v316 = vpop.f32.mrb[0].mxu0
    %v317 = vadd.f32 %v136, %v316
    %v318 = vpop.f32.mrb[0].mxu0
    %v319 = vpop.f32.mrb[0].mxu0
    %v320 = vadd.f32 %v136, %v319
    %v321 = vpop.f32.mrb[0].mxu0
    %322 = vmatprep.mubr.bf16.mxu0 0
    %323 = vmatmul.mubr.bf16.gmra.mrb[0].mxu0 %v177
    %v324 = vpop.f32.mrb[0].mxu0
    %v325 = vadd.f32 %v136, %v324
    %v326 = vpop.f32.mrb[0].mxu0
    %v327 = vpop.f32.mrb[0].mxu0
    %v328 = vadd.f32 %v136, %v327
    %v329 = vpop.f32.mrb[0].mxu0
    %330 = vdwg.mxu0
    %v331 = vmax.f32 %v269, 0.0
    %v332 = vmax.f32 %v272, 0.0
    %v333 = vmax.f32 %v277, 0.0
    %v334 = vmax.f32 %v280, 0.0
    %v335 = vmax.f32 %v285, 0.0
    %v336 = vmax.f32 %v288, 0.0
    %v337 = vmax.f32 %v293, 0.0
    %v338 = vmax.f32 %v296, 0.0
    %v339 = vmax.f32 %v301, 0.0
    %v340 = vmax.f32 %v304, 0.0
    %v341 = vmax.f32 %v309, 0.0
    %v342 = vmax.f32 %v312, 0.0
    %v343 = vmax.f32 %v317, 0.0
    %v344 = vmax.f32 %v320, 0.0
    %v345 = vmax.f32 %v325, 0.0
    %v346 = vmax.f32 %v328, 0.0
    %v347 = vpack.c.bf16 %v332, %v331
    %v348 = vpack.c.bf16 %v334, %v333
    %v349 = vpack.c.bf16 %v336, %v335
    %v350 = vpack.c.bf16 %v338, %v337
    %v351 = vpack.c.bf16 %v340, %v339
    %v352 = vpack.c.bf16 %v342, %v341
    %v353 = vpack.c.bf16 %v344, %v343
    %v354 = vpack.c.bf16 %v346, %v345
    %v355 = vld [vmem:[#allocation7] sm:$0xf]
    %v356 = vld [vmem:[#allocation7 + $0x4] sm:$0xf]
    %v357 = vld [vmem:[#allocation7 + $0x8] sm:$0xf]
    %v358 = vld [vmem:[#allocation7 + $0xc] sm:$0xf]
    %v359 = vld [vmem:[#allocation7 + $0x10] sm:$0xf]
    %v360 = vld [vmem:[#allocation7 + $0x14] sm:$0xf]
    %v361 = vld [vmem:[#allocation7 + $0x18] sm:$0xf]
    %v362 = vld [vmem:[#allocation7 + $0x1c] sm:$0xf]
    %v363 = vld [vmem:[#allocation7 + $0x20] sm:$0xf]
    %v364 = vld [vmem:[#allocation7 + $0x24] sm:$0xf]
    %v365 = vld [vmem:[#allocation7 + $0x28] sm:$0xf]
    %v366 = vld [vmem:[#allocation7 + $0x2c] sm:$0xf]
    %v367 = vld [vmem:[#allocation7 + $0x30] sm:$0xf]
    %v368 = vld [vmem:[#allocation7 + $0x34] sm:$0xf]
    %v369 = vld [vmem:[#allocation7 + $0x38] sm:$0xf]
    %v370 = vld [vmem:[#allocation7 + $0x3c] sm:$0xf]
    %v371 = vld [vmem:[%s4] sm:$0x1]
    %v373 = vlaneseq
    %v374 = vshrl.u32 %v373, 7
    %v375 = vsub.s32 0, %v374
    %v376 = vrot.slane %v371, %v375
    %v394 = vunpack.c.l.b16 %v355
    %v395 = vunpack.c.l.b16 %v356
    %v396 = vunpack.c.l.b16 %v357
    %v397 = vunpack.c.l.b16 %v358
    %v398 = vunpack.c.l.b16 %v359
    %v399 = vunpack.c.l.b16 %v360
    %v400 = vunpack.c.l.b16 %v361
    %v401 = vunpack.c.l.b16 %v362
    %v402 = vunpack.c.l.b16 %v363
    %v403 = vunpack.c.l.b16 %v364
    %v404 = vunpack.c.l.b16 %v365
    %v405 = vunpack.c.l.b16 %v366
    %v406 = vunpack.c.l.b16 %v367
    %v407 = vunpack.c.l.b16 %v368
    %v408 = vunpack.c.l.b16 %v369
    %v409 = vunpack.c.l.b16 %v370
    %v410 = vpack.c.b16 %v395, %v394
    %v411 = vpack.c.b16 %v397, %v396
    %v412 = vpack.c.b16 %v399, %v398
    %v413 = vpack.c.b16 %v401, %v400
    %v414 = vpack.c.b16 %v403, %v402
    %v415 = vpack.c.b16 %v405, %v404
    %v416 = vpack.c.b16 %v407, %v406
    %v417 = vpack.c.b16 %v409, %v408
    %426 = vmatprep.subr.bf16.mxu0 0
    %427 = vmatpush1.bf16.msra.mxu0 %v410
    %428 = vmatprep.subr.bf16.mxu0 0
    %429 = vmatpush1.bf16.msra.mxu0 %v411
    %430 = vmatprep.subr.bf16.mxu0 0
    %431 = vmatpush1.bf16.msra.mxu0 %v412
    %432 = vmatprep.subr.bf16.mxu0 0
    %433 = vmatpush1.bf16.msra.mxu0 %v413
    %434 = vmatprep.subr.bf16.mxu0 0
    %435 = vmatpush1.bf16.msra.mxu0 %v414
    %436 = vmatprep.subr.bf16.mxu0 0
    %437 = vmatpush1.bf16.msra.mxu0 %v415
    %438 = vmatprep.subr.bf16.mxu0 0
    %439 = vmatpush1.bf16.msra.mxu0 %v416
    %440 = vmatprep.subr.bf16.mxu0 0
    %441 = vmatpush1.bf16.msra.mxu0 %v417
    %442 = vmatprep.subr.bf16.mxu0 0
    %443 = vmatpush1.bf16.msra.mxu0 0
    %444 = vmatprep.subr.bf16.mxu0 0
    %445 = vmatpush1.bf16.msra.mxu0 0
    %446 = vmatprep.subr.bf16.mxu0 0
    %447 = vmatpush1.bf16.msra.mxu0 0
    %448 = vmatprep.subr.bf16.mxu0 0
    %449 = vmatpush1.bf16.msra.mxu0 0
    %450 = vmatprep.subr.bf16.mxu0 0
    %451 = vmatpush1.bf16.msra.mxu0 0
    %452 = vmatprep.subr.bf16.mxu0 0
    %453 = vmatpush1.bf16.msra.mxu0 0
    %454 = vmatprep.subr.bf16.mxu0 0
    %455 = vmatpush1.bf16.msra.mxu0 0
    %456 = vmatprep.subr.bf16.mxu0 0
    %457 = vmatpush1.bf16.msra.mxu0 0
    %458 = vmatprep.mubr.bf16.mxu0 0
    %459 = vmatmul.mubr.bf16.gmra.mrb[0].mxu0 %v347
    %v460 = vpop.f32.mrb[0].mxu0
    %v461 = vadd.f32 %v376, %v460
    %v462 = vpop.f32.mrb[0].mxu0
    %v463 = vpop.f32.mrb[0].mxu0
    %v464 = vadd.f32 %v376, %v463
    %v465 = vpop.f32.mrb[0].mxu0
    %466 = vmatprep.mubr.bf16.mxu0 0
    %467 = vmatmul.mubr.bf16.gmra.mrb[0].mxu0 %v348
    %v468 = vpop.f32.mrb[0].mxu0
    %v469 = vadd.f32 %v376, %v468
    %v470 = vpop.f32.mrb[0].mxu0
    %v471 = vpop.f32.mrb[0].mxu0
    %v472 = vadd.f32 %v376, %v471
    %v473 = vpop.f32.mrb[0].mxu0
    %474 = vmatprep.mubr.bf16.mxu0 0
    %475 = vmatmul.mubr.bf16.gmra.mrb[0].mxu0 %v349
    %v476 = vpop.f32.mrb[0].mxu0
    %v477 = vadd.f32 %v376, %v476
    %v478 = vpop.f32.mrb[0].mxu0
    %v479 = vpop.f32.mrb[0].mxu0
    %v480 = vadd.f32 %v376, %v479
    %v481 = vpop.f32.mrb[0].mxu0
    %482 = vmatprep.mubr.bf16.mxu0 0
    %483 = vmatmul.mubr.bf16.gmra.mrb[0].mxu0 %v350
    %v484 = vpop.f32.mrb[0].mxu0
    %v485 = vadd.f32 %v376, %v484
    %v486 = vpop.f32.mrb[0].mxu0
    %v487 = vpop.f32.mrb[0].mxu0
    %v488 = vadd.f32 %v376, %v487
    %v489 = vpop.f32.mrb[0].mxu0
    %490 = vmatprep.mubr.bf16.mxu0 0
    %491 = vmatmul.mubr.bf16.gmra.mrb[0].mxu0 %v351
    %v492 = vpop.f32.mrb[0].mxu0
    %v493 = vadd.f32 %v376, %v492
    %v494 = vpop.f32.mrb[0].mxu0
    %v495 = vpop.f32.mrb[0].mxu0
    %v496 = vadd.f32 %v376, %v495
    %v497 = vpop.f32.mrb[0].mxu0
    %498 = vmatprep.mubr.bf16.mxu0 0
    %499 = vmatmul.mubr.bf16.gmra.mrb[0].mxu0 %v352
    %v500 = vpop.f32.mrb[0].mxu0
    %v501 = vadd.f32 %v376, %v500
    %v502 = vpop.f32.mrb[0].mxu0
    %v503 = vpop.f32.mrb[0].mxu0
    %v504 = vadd.f32 %v376, %v503
    %v505 = vpop.f32.mrb[0].mxu0
    %506 = vmatprep.mubr.bf16.mxu0 0
    %507 = vmatmul.mubr.bf16.gmra.mrb[0].mxu0 %v353
    %v508 = vpop.f32.mrb[0].mxu0
    %v509 = vadd.f32 %v376, %v508
    %v510 = vpop.f32.mrb[0].mxu0
    %v511 = vpop.f32.mrb[0].mxu0
    %v512 = vadd.f32 %v376, %v511
    %v513 = vpop.f32.mrb[0].mxu0
    %514 = vmatprep.mubr.bf16.mxu0 0
    %515 = vmatmul.mubr.bf16.gmra.mrb[0].mxu0 %v354
    %v516 = vpop.f32.mrb[0].mxu0
    %v517 = vadd.f32 %v376, %v516
    %v518 = vpop.f32.mrb[0].mxu0
    %v519 = vpop.f32.mrb[0].mxu0
    %v520 = vadd.f32 %v376, %v519
    %v521 = vpop.f32.mrb[0].mxu0
    %522 = vdwg.mxu0
    %v523 = vmax.f32 %v461, 0.0
    %v524 = vmax.f32 %v464, 0.0
    %v525 = vmax.f32 %v469, 0.0
    %v526 = vmax.f32 %v472, 0.0
    %v527 = vmax.f32 %v477, 0.0
    %v528 = vmax.f32 %v480, 0.0
    %v529 = vmax.f32 %v485, 0.0
    %v530 = vmax.f32 %v488, 0.0
    %v531 = vmax.f32 %v493, 0.0
    %v532 = vmax.f32 %v496, 0.0
    %v533 = vmax.f32 %v501, 0.0
    %v534 = vmax.f32 %v504, 0.0
    %v535 = vmax.f32 %v509, 0.0
    %v536 = vmax.f32 %v512, 0.0
    %v537 = vmax.f32 %v517, 0.0
    %v538 = vmax.f32 %v520, 0.0
    %v539 = vpack.c.bf16 %v524, %v523
    %v540 = vpack.c.bf16 %v526, %v525
    %v541 = vpack.c.bf16 %v528, %v527
    %v542 = vpack.c.bf16 %v530, %v529
    %v543 = vpack.c.bf16 %v532, %v531
    %v544 = vpack.c.bf16 %v534, %v533
    %v545 = vpack.c.bf16 %v536, %v535
    %v546 = vpack.c.bf16 %v538, %v537
    %v547 = vld [vmem:[#allocation8] sm:$0xf]
    %v548 = vld [vmem:[#allocation8 + $0x4] sm:$0xf]
    %v549 = vld [vmem:[#allocation8 + $0x8] sm:$0xf]
    %v550 = vld [vmem:[#allocation8 + $0xc] sm:$0xf]
    %v551 = vld [vmem:[#allocation8 + $0x10] sm:$0xf]
    %v552 = vld [vmem:[#allocation8 + $0x14] sm:$0xf]
    %v553 = vld [vmem:[#allocation8 + $0x18] sm:$0xf]
    %v554 = vld [vmem:[#allocation8 + $0x1c] sm:$0xf]
    %v555 = vld [vmem:[#allocation8 + $0x20] sm:$0xf]
    %v556 = vld [vmem:[#allocation8 + $0x24] sm:$0xf]
    %v557 = vld [vmem:[#allocation8 + $0x28] sm:$0xf]
    %v558 = vld [vmem:[#allocation8 + $0x2c] sm:$0xf]
    %v559 = vld [vmem:[#allocation8 + $0x30] sm:$0xf]
    %v560 = vld [vmem:[#allocation8 + $0x34] sm:$0xf]
    %v561 = vld [vmem:[#allocation8 + $0x38] sm:$0xf]
    %v562 = vld [vmem:[#allocation8 + $0x3c] sm:$0xf]
    %v563 = vld [vmem:[%s6] sm:$0x1]
    %v565 = vlaneseq
    %v566 = vshrl.u32 %v565, 7
    %v567 = vsub.s32 0, %v566
    %v568 = vrot.slane %v563, %v567
    %v586 = vunpack.c.l.b16 %v547
    %v587 = vunpack.c.l.b16 %v548
    %v588 = vunpack.c.l.b16 %v549
    %v589 = vunpack.c.l.b16 %v550
    %v590 = vunpack.c.l.b16 %v551
    %v591 = vunpack.c.l.b16 %v552
    %v592 = vunpack.c.l.b16 %v553
    %v593 = vunpack.c.l.b16 %v554
    %v594 = vunpack.c.l.b16 %v555
    %v595 = vunpack.c.l.b16 %v556
    %v596 = vunpack.c.l.b16 %v557
    %v597 = vunpack.c.l.b16 %v558
    %v598 = vunpack.c.l.b16 %v559
    %v599 = vunpack.c.l.b16 %v560
    %v600 = vunpack.c.l.b16 %v561
    %v601 = vunpack.c.l.b16 %v562
    %v602 = vpack.c.b16 %v587, %v586
    %v603 = vpack.c.b16 %v589, %v588
    %v604 = vpack.c.b16 %v591, %v590
    %v605 = vpack.c.b16 %v593, %v592
    %v606 = vpack.c.b16 %v595, %v594
    %v607 = vpack.c.b16 %v597, %v596
    %v608 = vpack.c.b16 %v599, %v598
    %v609 = vpack.c.b16 %v601, %v600
    %618 = vmatprep.subr.bf16.mxu0 0
    %619 = vmatpush1.bf16.msra.mxu0 %v602
    %620 = vmatprep.subr.bf16.mxu0 0
    %621 = vmatpush1.bf16.msra.mxu0 %v603
    %622 = vmatprep.subr.bf16.mxu0 0
    %623 = vmatpush1.bf16.msra.mxu0 %v604
    %624 = vmatprep.subr.bf16.mxu0 0
    %625 = vmatpush1.bf16.msra.mxu0 %v605
    %626 = vmatprep.subr.bf16.mxu0 0
    %627 = vmatpush1.bf16.msra.mxu0 %v606
    %628 = vmatprep.subr.bf16.mxu0 0
    %629 = vmatpush1.bf16.msra.mxu0 %v607
    %630 = vmatprep.subr.bf16.mxu0 0
    %631 = vmatpush1.bf16.msra.mxu0 %v608
    %632 = vmatprep.subr.bf16.mxu0 0
    %633 = vmatpush1.bf16.msra.mxu0 %v609
    %634 = vmatprep.subr.bf16.mxu0 0
    %635 = vmatpush1.bf16.msra.mxu0 0
    %636 = vmatprep.subr.bf16.mxu0 0
    %637 = vmatpush1.bf16.msra.mxu0 0
    %638 = vmatprep.subr.bf16.mxu0 0
    %639 = vmatpush1.bf16.msra.mxu0 0
    %640 = vmatprep.subr.bf16.mxu0 0
    %641 = vmatpush1.bf16.msra.mxu0 0
    %642 = vmatprep.subr.bf16.mxu0 0
    %643 = vmatpush1.bf16.msra.mxu0 0
    %644 = vmatprep.subr.bf16.mxu0 0
    %645 = vmatpush1.bf16.msra.mxu0 0
    %646 = vmatprep.subr.bf16.mxu0 0
    %647 = vmatpush1.bf16.msra.mxu0 0
    %648 = vmatprep.subr.bf16.mxu0 0
    %649 = vmatpush1.bf16.msra.mxu0 0
    %650 = vmatprep.mubr.bf16.mxu0 0
    %651 = vmatmul.mubr.bf16.gmra.mrb[0].mxu0 %v539
    %v652 = vpop.f32.mrb[0].mxu0
    %v653 = vadd.f32 %v568, %v652
    %v654 = vpop.f32.mrb[0].mxu0
    %v655 = vpop.f32.mrb[0].mxu0
    %v656 = vadd.f32 %v568, %v655
    %v657 = vpop.f32.mrb[0].mxu0
    %658 = vmatprep.mubr.bf16.mxu0 0
    %659 = vmatmul.mubr.bf16.gmra.mrb[0].mxu0 %v540
    %v660 = vpop.f32.mrb[0].mxu0
    %v661 = vadd.f32 %v568, %v660
    %v662 = vpop.f32.mrb[0].mxu0
    %v663 = vpop.f32.mrb[0].mxu0
    %v664 = vadd.f32 %v568, %v663
    %v665 = vpop.f32.mrb[0].mxu0
    %666 = vmatprep.mubr.bf16.mxu0 0
    %667 = vmatmul.mubr.bf16.gmra.mrb[0].mxu0 %v541
    %v668 = vpop.f32.mrb[0].mxu0
    %v669 = vadd.f32 %v568, %v668
    %v670 = vpop.f32.mrb[0].mxu0
    %v671 = vpop.f32.mrb[0].mxu0
    %v672 = vadd.f32 %v568, %v671
    %v673 = vpop.f32.mrb[0].mxu0
    %674 = vmatprep.mubr.bf16.mxu0 0
    %675 = vmatmul.mubr.bf16.gmra.mrb[0].mxu0 %v542
    %v676 = vpop.f32.mrb[0].mxu0
    %v677 = vadd.f32 %v568, %v676
    %v678 = vpop.f32.mrb[0].mxu0
    %v679 = vpop.f32.mrb[0].mxu0
    %v680 = vadd.f32 %v568, %v679
    %v681 = vpop.f32.mrb[0].mxu0
    %682 = vmatprep.mubr.bf16.mxu0 0
    %683 = vmatmul.mubr.bf16.gmra.mrb[0].mxu0 %v543
    %v684 = vpop.f32.mrb[0].mxu0
    %v685 = vadd.f32 %v568, %v684
    %v686 = vpop.f32.mrb[0].mxu0
    %v687 = vpop.f32.mrb[0].mxu0
    %v688 = vadd.f32 %v568, %v687
    %v689 = vpop.f32.mrb[0].mxu0
    %690 = vmatprep.mubr.bf16.mxu0 0
    %691 = vmatmul.mubr.bf16.gmra.mrb[0].mxu0 %v544
    %v692 = vpop.f32.mrb[0].mxu0
    %v693 = vadd.f32 %v568, %v692
    %v694 = vpop.f32.mrb[0].mxu0
    %v695 = vpop.f32.mrb[0].mxu0
    %v696 = vadd.f32 %v568, %v695
    %v697 = vpop.f32.mrb[0].mxu0
    %698 = vmatprep.mubr.bf16.mxu0 0
    %699 = vmatmul.mubr.bf16.gmra.mrb[0].mxu0 %v545
    %v700 = vpop.f32.mrb[0].mxu0
    %v701 = vadd.f32 %v568, %v700
    %v702 = vpop.f32.mrb[0].mxu0
    %v703 = vpop.f32.mrb[0].mxu0
    %v704 = vadd.f32 %v568, %v703
    %v705 = vpop.f32.mrb[0].mxu0
    %706 = vmatprep.mubr.bf16.mxu0 0
    %707 = vmatmul.mubr.bf16.gmra.mrb[0].mxu0 %v546
    %v708 = vpop.f32.mrb[0].mxu0
    %v709 = vadd.f32 %v568, %v708
    %v710 = vpop.f32.mrb[0].mxu0
    %v711 = vpop.f32.mrb[0].mxu0
    %v712 = vadd.f32 %v568, %v711
    %v713 = vpop.f32.mrb[0].mxu0
    %714 = vdwg.mxu0
    %v715 = vpack.c.bf16 %v656, %v653
    %v716 = vpack.c.bf16 %v664, %v661
    %v717 = vpack.c.bf16 %v672, %v669
    %v718 = vpack.c.bf16 %v680, %v677
    %v719 = vpack.c.bf16 %v688, %v685
    %v720 = vpack.c.bf16 %v696, %v693
    %v721 = vpack.c.bf16 %v704, %v701
    %v722 = vpack.c.bf16 %v712, %v709
    %v723 = vld [vmem:[#allocation10] sm:$0xf]
    %v724 = vld [vmem:[#allocation10 + $0x4] sm:$0xf]
    %v725 = vld [vmem:[#allocation10 + $0x8] sm:$0xf]
    %v726 = vld [vmem:[#allocation10 + $0xc] sm:$0xf]
    %v727 = vld [vmem:[#allocation10 + $0x10] sm:$0xf]
    %v728 = vld [vmem:[#allocation10 + $0x14] sm:$0xf]
    %v729 = vld [vmem:[#allocation10 + $0x18] sm:$0xf]
    %v730 = vld [vmem:[#allocation10 + $0x1c] sm:$0xf]
    %v731 = vld [vmem:[#allocation10 + $0x20] sm:$0xf]
    %v732 = vld [vmem:[#allocation10 + $0x24] sm:$0xf]
    %v733 = vld [vmem:[#allocation10 + $0x28] sm:$0xf]
    %v734 = vld [vmem:[#allocation10 + $0x2c] sm:$0xf]
    %v735 = vld [vmem:[#allocation10 + $0x30] sm:$0xf]
    %v736 = vld [vmem:[#allocation10 + $0x34] sm:$0xf]
    %v737 = vld [vmem:[#allocation10 + $0x38] sm:$0xf]
    %v738 = vld [vmem:[#allocation10 + $0x3c] sm:$0xf]
    %v755 = vunpack.c.l.b16 %v723
    %v756 = vunpack.c.l.b16 %v724
    %v757 = vunpack.c.l.b16 %v725
    %v758 = vunpack.c.l.b16 %v726
    %v759 = vunpack.c.l.b16 %v727
    %v760 = vunpack.c.l.b16 %v728
    %v761 = vunpack.c.l.b16 %v729
    %v762 = vunpack.c.l.b16 %v730
    %v763 = vunpack.c.l.b16 %v731
    %v764 = vunpack.c.l.b16 %v732
    %v765 = vunpack.c.l.b16 %v733
    %v766 = vunpack.c.l.b16 %v734
    %v767 = vunpack.c.l.b16 %v735
    %v768 = vunpack.c.l.b16 %v736
    %v769 = vunpack.c.l.b16 %v737
    %v770 = vunpack.c.l.b16 %v738
    %v771 = vpack.c.b16 %v756, %v755
    %v772 = vpack.c.b16 %v758, %v757
    %v773 = vpack.c.b16 %v760, %v759
    %v774 = vpack.c.b16 %v762, %v761
    %v775 = vpack.c.b16 %v764, %v763
    %v776 = vpack.c.b16 %v766, %v765
    %v777 = vpack.c.b16 %v768, %v767
    %v778 = vpack.c.b16 %v770, %v769
    %787 = vmatprep.subr.bf16.mxu0 0
    %788 = vmatpush1.bf16.msra.mxu0 %v771
    %789 = vmatprep.subr.bf16.mxu0 0
    %790 = vmatpush1.bf16.msra.mxu0 %v772
    %791 = vmatprep.subr.bf16.mxu0 0
    %792 = vmatpush1.bf16.msra.mxu0 %v773
    %793 = vmatprep.subr.bf16.mxu0 0
    %794 = vmatpush1.bf16.msra.mxu0 %v774
    %795 = vmatprep.subr.bf16.mxu0 0
    %796 = vmatpush1.bf16.msra.mxu0 %v775
    %797 = vmatprep.subr.bf16.mxu0 0
    %798 = vmatpush1.bf16.msra.mxu0 %v776
    %799 = vmatprep.subr.bf16.mxu0 0
    %800 = vmatpush1.bf16.msra.mxu0 %v777
    %801 = vmatprep.subr.bf16.mxu0 0
    %802 = vmatpush1.bf16.msra.mxu0 %v778
    %803 = vmatprep.subr.bf16.mxu0 0
    %804 = vmatpush1.bf16.msra.mxu0 0
    %805 = vmatprep.subr.bf16.mxu0 0
    %806 = vmatpush1.bf16.msra.mxu0 0
    %807 = vmatprep.subr.bf16.mxu0 0
    %808 = vmatpush1.bf16.msra.mxu0 0
    %809 = vmatprep.subr.bf16.mxu0 0
    %810 = vmatpush1.bf16.msra.mxu0 0
    %811 = vmatprep.subr.bf16.mxu0 0
    %812 = vmatpush1.bf16.msra.mxu0 0
    %813 = vmatprep.subr.bf16.mxu0 0
    %814 = vmatpush1.bf16.msra.mxu0 0
    %815 = vmatprep.subr.bf16.mxu0 0
    %816 = vmatpush1.bf16.msra.mxu0 0
    %817 = vmatprep.subr.bf16.mxu0 0
    %818 = vmatpush1.bf16.msra.mxu0 0
    %819 = vmatprep.mubr.bf16.mxu0 0
    %820 = vmatmul.mubr.bf16.gmra.mrb[0].mxu0 %v715
    %v821 = vpop.f32.mrb[0].mxu0
    %v822 = vadd.f32 0.0, %v821
    %v823 = vpop.f32.mrb[0].mxu0
    %v824 = vpop.f32.mrb[0].mxu0
    %v825 = vadd.f32 0.0, %v824
    %v826 = vpop.f32.mrb[0].mxu0
    %827 = vmatprep.mubr.bf16.mxu0 0
    %828 = vmatmul.mubr.bf16.gmra.mrb[0].mxu0 %v716
    %v829 = vpop.f32.mrb[0].mxu0
    %v830 = vadd.f32 0.0, %v829
    %v831 = vpop.f32.mrb[0].mxu0
    %v832 = vpop.f32.mrb[0].mxu0
    %v833 = vadd.f32 0.0, %v832
    %v834 = vpop.f32.mrb[0].mxu0
    %835 = vmatprep.mubr.bf16.mxu0 0
    %836 = vmatmul.mubr.bf16.gmra.mrb[0].mxu0 %v717
    %v837 = vpop.f32.mrb[0].mxu0
    %v838 = vadd.f32 0.0, %v837
    %v839 = vpop.f32.mrb[0].mxu0
    %v840 = vpop.f32.mrb[0].mxu0
    %v841 = vadd.f32 0.0, %v840
    %v842 = vpop.f32.mrb[0].mxu0
    %843 = vmatprep.mubr.bf16.mxu0 0
    %844 = vmatmul.mubr.bf16.gmra.mrb[0].mxu0 %v718
    %v845 = vpop.f32.mrb[0].mxu0
    %v846 = vadd.f32 0.0, %v845
    %v847 = vpop.f32.mrb[0].mxu0
    %v848 = vpop.f32.mrb[0].mxu0
    %v849 = vadd.f32 0.0, %v848
    %v850 = vpop.f32.mrb[0].mxu0
    %851 = vmatprep.mubr.bf16.mxu0 0
    %852 = vmatmul.mubr.bf16.gmra.mrb[0].mxu0 %v719
    %v853 = vpop.f32.mrb[0].mxu0
    %v854 = vadd.f32 0.0, %v853
    %v855 = vpop.f32.mrb[0].mxu0
    %v856 = vpop.f32.mrb[0].mxu0
    %v857 = vadd.f32 0.0, %v856
    %v858 = vpop.f32.mrb[0].mxu0
    %859 = vmatprep.mubr.bf16.mxu0 0
    %860 = vmatmul.mubr.bf16.gmra.mrb[0].mxu0 %v720
    %v861 = vpop.f32.mrb[0].mxu0
    %v862 = vadd.f32 0.0, %v861
    %v863 = vpop.f32.mrb[0].mxu0
    %v864 = vpop.f32.mrb[0].mxu0
    %v865 = vadd.f32 0.0, %v864
    %v866 = vpop.f32.mrb[0].mxu0
    %867 = vmatprep.mubr.bf16.mxu0 0
    %868 = vmatmul.mubr.bf16.gmra.mrb[0].mxu0 %v721
    %v869 = vpop.f32.mrb[0].mxu0
    %v870 = vadd.f32 0.0, %v869
    %v871 = vpop.f32.mrb[0].mxu0
    %v872 = vpop.f32.mrb[0].mxu0
    %v873 = vadd.f32 0.0, %v872
    %v874 = vpop.f32.mrb[0].mxu0
    %875 = vmatprep.mubr.bf16.mxu0 0
    %876 = vmatmul.mubr.bf16.gmra.mrb[0].mxu0 %v722
    %v877 = vpop.f32.mrb[0].mxu0
    %v878 = vadd.f32 0.0, %v877
    %v879 = vpop.f32.mrb[0].mxu0
    %v880 = vpop.f32.mrb[0].mxu0
    %v881 = vadd.f32 0.0, %v880
    %v882 = vpop.f32.mrb[0].mxu0
    %883 = vdwg.mxu0
    %v884 = vpack.c.bf16 %v825, %v822
    %v885 = vpack.c.bf16 %v833, %v830
    %v886 = vpack.c.bf16 %v841, %v838
    %v887 = vpack.c.bf16 %v849, %v846
    %v888 = vpack.c.bf16 %v857, %v854
    %v889 = vpack.c.bf16 %v865, %v862
    %v890 = vpack.c.bf16 %v873, %v870
    %v891 = vpack.c.bf16 %v881, %v878
    %v900 = vunpack.c.l.b16 %v884
    %v901 = vunpack.c.h.b16 %v884
    %v902 = vunpack.c.l.b16 %v885
    %v903 = vunpack.c.h.b16 %v885
    %v904 = vunpack.c.l.b16 %v886
    %v905 = vunpack.c.h.b16 %v886
    %v906 = vunpack.c.l.b16 %v887
    %v907 = vunpack.c.h.b16 %v887
    %v908 = vunpack.c.l.b16 %v888
    %v909 = vunpack.c.h.b16 %v888
    %v910 = vunpack.c.l.b16 %v889
    %v911 = vunpack.c.h.b16 %v889
    %v912 = vunpack.c.l.b16 %v890
    %v913 = vunpack.c.h.b16 %v890
    %v914 = vunpack.c.l.b16 %v891
    %v915 = vunpack.c.h.b16 %v891
    %v916 = vpack.c.b16 %v900, %v900
    %v917 = vpack.c.b16 %v901, %v901
    %v918 = vpack.c.b16 %v902, %v902
    %v919 = vpack.c.b16 %v903, %v903
    %v920 = vpack.c.b16 %v904, %v904
    %v921 = vpack.c.b16 %v905, %v905
    %v922 = vpack.c.b16 %v906, %v906
    %v923 = vpack.c.b16 %v907, %v907
    %v924 = vpack.c.b16 %v908, %v908
    %v925 = vpack.c.b16 %v909, %v909
    %v926 = vpack.c.b16 %v910, %v910
    %v927 = vpack.c.b16 %v911, %v911
    %v928 = vpack.c.b16 %v912, %v912
    %v929 = vpack.c.b16 %v913, %v913
    %v930 = vpack.c.b16 %v914, %v914
    %v931 = vpack.c.b16 %v915, %v915
    %948 = vst [vmem:[#allocation11] sm:$0xf] %v916
    %949 = vst [vmem:[#allocation11 + $0x4] sm:$0xf] %v917
    %950 = vst [vmem:[#allocation11 + $0x8] sm:$0xf] %v918
    %951 = vst [vmem:[#allocation11 + $0xc] sm:$0xf] %v919
    %952 = vst [vmem:[#allocation11 + $0x10] sm:$0xf] %v920
    %953 = vst [vmem:[#allocation11 + $0x14] sm:$0xf] %v921
    %954 = vst [vmem:[#allocation11 + $0x18] sm:$0xf] %v922
    %955 = vst [vmem:[#allocation11 + $0x1c] sm:$0xf] %v923
    %956 = vst [vmem:[#allocation11 + $0x20] sm:$0xf] %v924
    %957 = vst [vmem:[#allocation11 + $0x24] sm:$0xf] %v925
    %958 = vst [vmem:[#allocation11 + $0x28] sm:$0xf] %v926
    %959 = vst [vmem:[#allocation11 + $0x2c] sm:$0xf] %v927
    %960 = vst [vmem:[#allocation11 + $0x30] sm:$0xf] %v928
    %961 = vst [vmem:[#allocation11 + $0x34] sm:$0xf] %v929
    %962 = vst [vmem:[#allocation11 + $0x38] sm:$0xf] %v930
    %963 = vst [vmem:[#allocation11 + $0x3c] sm:$0xf] %v931
    // Predicated region
    $region54: #{tpu_custom_call.1} parent=1 // pred_check
      _
    $region55: #{tpu_custom_call.1} parent=1 // pred_check_branch
      %965 = sbr.rel (0) target = $region57
    $region56: #{tpu_custom_call.1} parent=1 // pred_region
      %s967 = ssub.s32 1024, 1024
      %968 = vsyncadd [#allocation4], %s967
      %s969 = sshll.u32 [#allocation11], 4
      %s970 = int_to_ptr.vmem [resolvable:$true] %s969
      %975 = dma.vmem_to_hbm [thread:$0]  %s970, 1024, %s8, [#allocation4], 64, 64, 4
    $region57: #{tpu_custom_call.1} parent=1 // pred_fallthru
      _
    // Predicated region
    $region58: #{tpu_custom_call.1} parent=1 // pred_check
      _
    $region59: #{tpu_custom_call.1} parent=1 // pred_check_branch
      %977 = sbr.rel (0) target = $region61
    $region60: #{tpu_custom_call.1} parent=1 // pred_region
      %978 = dma.done [#allocation4], 1024
    $region61: #{tpu_custom_call.1} parent=1 // pred_fallthru
      _
    %979 = vsyncpa [#allocation3], 1
    %980 = vsyncpa [#allocation6], 1
    %981 = vsyncpa [#allocation9], 1
    %982 = vsyncpa [#allocation4], 1

</llo_original>
